<compile_context>
chip_gen: v5e
topology: v5e:2x2
jax: 0.10.0
libtpu: 0.0.40
codegen_flags: <defaults>
</compile_context>

<pallas_src>
import functools

import jax
import jax.numpy as jnp
from jax import lax
from jax.experimental import pallas as pl
from jax.experimental.pallas import tpu as pltpu


def _round_up(x, m):
    return (x + m - 1) // m * m


# ---------------------------------------------------------------------------
# Parameter preparation: cast / transpose once, outside the hot path.
# ---------------------------------------------------------------------------

def prepare_params(params, compute_dtype=jnp.bfloat16):
    w1h, w1z, b1, w2, b2 = params
    return {
        # forward (logits) path: bf16 matmul operands, f32 biases / accumulation
        "w1h": w1h.astype(compute_dtype),
        "w1z": w1z.astype(compute_dtype),
        "b1": b1.astype(jnp.float32),
        "w2": w2.astype(compute_dtype),
        "b2": b2.astype(jnp.float32),
        # sample path: f32 weights; W2/b2 transposed so per-step row reads are
        # dynamic *sublane* slices (cheap), not lane slices.
        "w1h_s": w1h.astype(jnp.float32),
        "w1z_s": w1z.astype(jnp.float32),
        "b1_s": b1.astype(jnp.float32),
        "w2t_s": jnp.transpose(w2).astype(jnp.float32),   # (E, H)
        "b2t_s": jnp.transpose(b2).astype(jnp.float32),   # (E, 1)
    }


# ---------------------------------------------------------------------------
# forward(): Bernoulli logits = conditioner(concat([history, z]))
# ---------------------------------------------------------------------------

def _forward_kernel(h_ref, z_ref, w1h_ref, w1z_ref, b1_ref, w2_ref, b2_ref,
                    out_ref):
    dt = w1h_ref.dtype
    # concat([history, z]) @ W1  ==  history @ W1h + z @ W1z  (fused in-kernel,
    # no wrapper-side concat/pad round-trip through HBM).
    pre = (jnp.dot(h_ref[...].astype(dt), w1h_ref[...],
                   preferred_element_type=jnp.float32)
           + jnp.dot(z_ref[...].astype(dt), w1z_ref[...],
                     preferred_element_type=jnp.float32)
           + b1_ref[...])
    hidden = jnp.maximum(pre, 0.0)                       # f32 VPU work
    logits = jnp.dot(hidden.astype(w2_ref.dtype), w2_ref[...],
                     preferred_element_type=jnp.float32) + b2_ref[...]
    out_ref[...] = logits.astype(out_ref.dtype)


def autoregressive_likelihood_logits(history, z, prepared, *, block_b=512):
    """Bernoulli logits [B, event_size] of Independent(Bernoulli(logits), 1)."""
    w1h, w1z, b1, w2, b2 = (prepared["w1h"], prepared["w1z"], prepared["b1"],
                            prepared["w2"], prepared["b2"])
    B, E = history.shape
    Z = z.shape[-1]
    H = w1h.shape[1]

    TB = min(block_b, _round_up(B, 16))   # 16-row multiple for bf16 sublane packing
    Bp = _round_up(B, TB)
    if Bp != B:
        history = jnp.pad(history, ((0, Bp - B), (0, 0)))
        z = jnp.pad(z, ((0, Bp - B), (0, 0)))

    cost = pl.CostEstimate(
        flops=2 * Bp * (E + Z) * H + 2 * Bp * H * E,
        transcendentals=0,
        bytes_accessed=(history.size * history.dtype.itemsize
                        + z.size * z.dtype.itemsize
                        + w1h.size * w1h.dtype.itemsize
                        + w1z.size * w1z.dtype.itemsize
                        + w2.size * w2.dtype.itemsize
                        + b1.size * 4 + b2.size * 4 + Bp * E * 4))

    out = pl.pallas_call(
        _forward_kernel,
        out_shape=jax.ShapeDtypeStruct((Bp, E), jnp.float32),
        grid=(Bp // TB,),
        in_specs=[
            pl.BlockSpec((TB, E), lambda i: (i, 0)),
            pl.BlockSpec((TB, Z), lambda i: (i, 0)),
            pl.BlockSpec((E, H), lambda i: (0, 0)),   # weights VMEM-resident
            pl.BlockSpec((Z, H), lambda i: (0, 0)),
            pl.BlockSpec((1, H), lambda i: (0, 0)),
            pl.BlockSpec((H, E), lambda i: (0, 0)),
            pl.BlockSpec((1, E), lambda i: (0, 0)),
        ],
        out_specs=pl.BlockSpec((TB, E), lambda i: (i, 0)),
        compiler_params=pltpu.CompilerParams(
            dimension_semantics=("parallel",)),
        cost_estimate=cost,
    )(history, z, w1h, w1z, b1, w2, b2)
    return out[:B] if Bp != B else out


# ---------------------------------------------------------------------------
# sample(): fused autoregressive sampling loop in one kernel.
#   - layer 1: one full matmul to init, then rank-1 VPU updates per step
#   - layer 2: single-row W2ᵀ dot (VPU mul + lane reduce) per step
#   - randomness: pre-drawn logistic noise (no TPU-only PRNG primitives)
# ---------------------------------------------------------------------------

def _sample_kernel(hist0_ref, z_ref, g_ref, w1h_ref, w1z_ref, b1_ref,
                   w2t_ref, b2t_ref, out_ref, pre_ref, *, event_size,
                   start_from):
    # Running layer-1 pre-activation for the *current* outcome, in VMEM scratch.
    pre_ref[...] = (
        jnp.dot(hist0_ref[...], w1h_ref[...], preferred_element_type=jnp.float32)
        + jnp.dot(z_ref[...], w1z_ref[...], preferred_element_type=jnp.float32)
        + b1_ref[...])
    out_ref[...] = hist0_ref[...]                       # outcome := history

    col = lax.broadcasted_iota(jnp.int32, out_ref.shape, 1)   # (TB, E)
    g = g_ref[...]                                            # logistic noise

    def body(d, carry):
        sel = col == d
        hidden = jnp.maximum(pre_ref[...], 0.0)               # (TB, H)
        w2_row = w2t_ref[pl.ds(d, 1), :]                      # (1, H)
        logit_d = (jnp.sum(hidden * w2_row, axis=-1, keepdims=True)
                   + b2t_ref[pl.ds(d, 1), :])                 # (TB, 1)
        # column-d extraction via masked lane-reduce (no dynamic lane slicing)
        g_d = jnp.sum(jnp.where(sel, g, 0.0), axis=-1, keepdims=True)
        old_d = jnp.sum(jnp.where(sel, out_ref[...], 0.0), axis=-1,
                        keepdims=True)
        # 1{g < logit} == Bernoulli(sigmoid(logit))
        draw = (g_d < logit_d).astype(jnp.float32)            # (TB, 1)
        # incremental rank-1 layer-1 update: VPU broadcast-FMA, no MXU push
        w1_row = w1h_ref[pl.ds(d, 1), :]                      # (1, H)
        pre_ref[...] = pre_ref[...] + (draw - old_d) * w1_row
        out_ref[...] = jnp.where(sel, draw, out_ref[...])
        return carry

    lax.fori_loop(start_from, event_size, body, 0)


def autoregressive_likelihood_sample(history, z, prepared, key, *,
                                     start_from=0, block_b=128):
    """Mirrors AutoregressiveLikelihood.sample(): sequentially resamples
    outcome[..., d] ~ Bernoulli(logits_d(outcome_{<d}, z)) for d >= start_from."""
    w1h, w1z, b1, w2t, b2t = (prepared["w1h_s"], prepared["w1z_s"],
                              prepared["b1_s"], prepared["w2t_s"],
                              prepared["b2t_s"])
    B, E = history.shape
    Z = z.shape[-1]
    H = w1h.shape[1]

    TB = min(block_b, _round_up(B, 8))    # small tile: loop carry stays in vregs
    Bp = _round_up(B, TB)

    hist0 = history.astype(jnp.float32)
    zf = z.astype(jnp.float32)
    g = jax.random.logistic(key, (B, E), jnp.float32)   # one draw per (b, d)
    if Bp != B:
        hist0 = jnp.pad(hist0, ((0, Bp - B), (0, 0)))
        zf = jnp.pad(zf, ((0, Bp - B), (0, 0)))
        g = jnp.pad(g, ((0, Bp - B), (0, 0)))

    kernel = functools.partial(_sample_kernel, event_size=E,
                               start_from=start_from)

    out = pl.pallas_call(
        kernel,
        out_shape=jax.ShapeDtypeStruct((Bp, E), jnp.float32),
        grid=(Bp // TB,),
        in_specs=[
            pl.BlockSpec((TB, E), lambda i: (i, 0)),
            pl.BlockSpec((TB, Z), lambda i: (i, 0)),
            pl.BlockSpec((TB, E), lambda i: (i, 0)),
            pl.BlockSpec((E, H), lambda i: (0, 0)),    # weights VMEM-resident
            pl.BlockSpec((Z, H), lambda i: (0, 0)),
            pl.BlockSpec((1, H), lambda i: (0, 0)),
            pl.BlockSpec((E, H), lambda i: (0, 0)),    # W2ᵀ
            pl.BlockSpec((E, 1), lambda i: (0, 0)),    # b2ᵀ
        ],
        out_specs=pl.BlockSpec((TB, E), lambda i: (i, 0)),
        scratch_shapes=[pltpu.VMEM((TB, H), jnp.float32)],   # running pre-act
        input_output_aliases={0: 0},       # write samples in place of hist0
        compiler_params=pltpu.CompilerParams(
            dimension_semantics=("parallel",)),
    )(hist0, zf, g, w1h, w1z, b1, w2t, b2t)
    return out[:B] if Bp != B else out


# ---------------------------------------------------------------------------
# Plain-JAX glue: MADE-style masked conditioner parameters + references.
# ---------------------------------------------------------------------------

def make_made_params(key, event_size, z_size, hidden_size):
    """MADE-style masked-MLP conditioner parameters; masks folded into weights."""
    k1, k2, k3 = jax.random.split(key, 3)
    scale1 = 1.0 / jnp.sqrt(event_size + z_size)
    scale2 = 1.0 / jnp.sqrt(hidden_size)
    w1h = jax.random.normal(k1, (event_size, hidden_size), jnp.float32) * scale1
    w1z = jax.random.normal(k2, (z_size, hidden_size), jnp.float32) * scale1
    w2 = jax.random.normal(k3, (hidden_size, event_size), jnp.float32) * scale2
    b1 = jnp.zeros((1, hidden_size), jnp.float32)
    b2 = jnp.zeros((1, event_size), jnp.float32)

    # MADE degrees: history inputs get degrees 1..E, z is context (unmasked).
    in_deg = jnp.arange(1, event_size + 1)                               # [E]
    hid_deg = (jnp.arange(hidden_size) % max(event_size - 1, 1)) + 1     # [H]
    out_deg = jnp.arange(1, event_size + 1)                              # [E]
    mask1 = (hid_deg[None, :] >= in_deg[:, None]).astype(jnp.float32)    # [E, H]
    mask2 = (out_deg[None, :] > hid_deg[:, None]).astype(jnp.float32)    # [H, E]
    # NOTE: with this pure-MADE mask, logit 0 depends only on b2 (no z skip
    # path at the output layer); this matches the in-file reference.

    return (w1h * mask1, w1z, b1, w2 * mask2, b2)


def _reference_logits(history, z, params, compute_dtype=jnp.float32):
    w1h, w1z, b1, w2, b2 = params
    h = jnp.concatenate([history, z], axis=-1).astype(compute_dtype)
    w1 = jnp.concatenate([w1h, w1z], axis=0).astype(compute_dtype)
    hidden = jnp.maximum(
        jnp.dot(h, w1, preferred_element_type=jnp.float32,
                precision=lax.Precision.HIGHEST) + b1, 0.0)
    return jnp.dot(hidden.astype(compute_dtype), w2.astype(compute_dtype),
                   preferred_element_type=jnp.float32,
                   precision=lax.Precision.HIGHEST) + b2


def _reference_sample(history, z, params, g, start_from=0):
    outcome = history.astype(jnp.float32)
    E = history.shape[-1]
    for d in range(start_from, E):
        logits = _reference_logits(outcome, z, params, compute_dtype=jnp.float32)
        draw = (g[:, d] < logits[:, d]).astype(jnp.float32)
        outcome = outcome.at[:, d].set(draw)
    return outcome


if __name__ == "__main__":
    B, E, Z, H = 8, 16, 16, 32   # batch, event_size, z dim, hidden
    key = jax.random.PRNGKey(0)
    k_hist, k_z, k_p, k_noise = jax.random.split(key, 4)

    # history = x (binary events), inputs = z (latent conditioning context)
    history = (jax.random.uniform(k_hist, (B, E)) > 0.5).astype(jnp.float32)
    z = jax.random.normal(k_z, (B, Z), jnp.float32)
    params = make_made_params(k_p, E, Z, H)
    prepared = prepare_params(params)

    # forward(): distribution parameters (Bernoulli logits)
    logits = autoregressive_likelihood_logits(history, z, prepared)
    logits = jax.block_until_ready(logits)
    assert logits.shape == (B, E)

    ref_bf16 = _reference_logits(history, z, params, compute_dtype=jnp.bfloat16)
    ref_f32 = _reference_logits(history, z, params, compute_dtype=jnp.float32)
    assert jnp.allclose(logits, ref_bf16, atol=5e-3, rtol=5e-3)
    assert jnp.allclose(logits, ref_f32, atol=1.5e-1, rtol=1.5e-1)

    # sample(): fused per-dimension autoregressive resampling in one kernel.
    samples = autoregressive_likelihood_sample(
        jnp.zeros_like(history), z, prepared, k_noise)
    samples = jax.block_until_ready(samples)
    assert samples.shape == (B, E)
    assert bool(jnp.all((samples == 0.0) | (samples == 1.0)))

    # Exact check against the sequential plain-JAX reference with the same noise.
    g = jax.random.logistic(k_noise, (B, E), jnp.float32)
    ref_samples = _reference_sample(jnp.zeros_like(history), z, params, g)
    assert bool(jnp.array_equal(samples, ref_samples))

    # TODO(synk): constructing the torch.distributions Independent(Bernoulli)
    # object itself is host-side framework glue; the kernel emits its logits.
    print("KERNEL_OK")
</pallas_src>

<mosaic_0001>
module attributes {stable_mosaic.version = 11 : i64} {
  func.func @_forward_kernel(%arg0: i32, %arg1: memref<16x16xf32, #tpu.memory_space<vmem>>, %arg2: memref<16x16xf32, #tpu.memory_space<vmem>>, %arg3: memref<16x32xbf16, #tpu.memory_space<vmem>>, %arg4: memref<16x32xbf16, #tpu.memory_space<vmem>>, %arg5: memref<1x32xf32, #tpu.memory_space<vmem>>, %arg6: memref<32x16xbf16, #tpu.memory_space<vmem>>, %arg7: memref<1x16xf32, #tpu.memory_space<vmem>>, %arg8: memref<16x16xf32, #tpu.memory_space<vmem>>) attributes {dimension_semantics = [#tpu.dimension_semantics<parallel>], iteration_bounds = array<i64: 1>, scalar_prefetch = 0 : i64, scratch_operands = 0 : i64, tpu.core_type = #tpu.core_type<tc>, window_params = [{transform_indices = @transform_0, window_bounds = array<i64: 16, 16>}, {transform_indices = @transform_1, window_bounds = array<i64: 16, 16>}, {pipeline_mode = #tpu.pipeline_mode<synchronous>, transform_indices = @transform_2, window_bounds = array<i64: 16, 32>}, {pipeline_mode = #tpu.pipeline_mode<synchronous>, transform_indices = @transform_3, window_bounds = array<i64: 16, 32>}, {pipeline_mode = #tpu.pipeline_mode<synchronous>, transform_indices = @transform_4, window_bounds = array<i64: 1, 32>}, {pipeline_mode = #tpu.pipeline_mode<synchronous>, transform_indices = @transform_5, window_bounds = array<i64: 32, 16>}, {pipeline_mode = #tpu.pipeline_mode<synchronous>, transform_indices = @transform_6, window_bounds = array<i64: 1, 16>}, {transform_indices = @transform_7, window_bounds = array<i64: 16, 16>}]} {
    %c0 = arith.constant 0 : index
    %c0_0 = arith.constant 0 : index
    %0 = vector.load %arg1[%c0, %c0_0] : memref<16x16xf32, #tpu.memory_space<vmem>>, vector<16x16xf32>
    %1 = arith.truncf %0 : vector<16x16xf32> to vector<16x16xbf16>
    %c0_1 = arith.constant 0 : index
    %c0_2 = arith.constant 0 : index
    %2 = vector.load %arg3[%c0_1, %c0_2] : memref<16x32xbf16, #tpu.memory_space<vmem>>, vector<16x32xbf16>
    %cst = arith.constant dense<0.000000e+00> : vector<16x32xf32>
    %3 = tpu.matmul %1, %2, %cst {dimension_numbers = #tpu.dot_dimension_numbers<[1], [0], [0], [1], [0, 0, 1, 1], [], []>} : vector<16x16xbf16>, vector<16x32xbf16>, vector<16x32xf32> -> vector<16x32xf32>
    %c0_3 = arith.constant 0 : index
    %c0_4 = arith.constant 0 : index
    %4 = vector.load %arg2[%c0_3, %c0_4] : memref<16x16xf32, #tpu.memory_space<vmem>>, vector<16x16xf32>
    %5 = arith.truncf %4 : vector<16x16xf32> to vector<16x16xbf16>
    %c0_5 = arith.constant 0 : index
    %c0_6 = arith.constant 0 : index
    %6 = vector.load %arg4[%c0_5, %c0_6] : memref<16x32xbf16, #tpu.memory_space<vmem>>, vector<16x32xbf16>
    %cst_7 = arith.constant dense<0.000000e+00> : vector<16x32xf32>
    %7 = tpu.matmul %5, %6, %cst_7 {dimension_numbers = #tpu.dot_dimension_numbers<[1], [0], [0], [1], [0, 0, 1, 1], [], []>} : vector<16x16xbf16>, vector<16x32xbf16>, vector<16x32xf32> -> vector<16x32xf32>
    %8 = arith.addf %3, %7 : vector<16x32xf32>
    %c0_8 = arith.constant 0 : index
    %c0_9 = arith.constant 0 : index
    %9 = vector.load %arg5[%c0_8, %c0_9] : memref<1x32xf32, #tpu.memory_space<vmem>>, vector<1x32xf32>
    %10 = vector.broadcast %9 : vector<1x32xf32> to vector<16x32xf32>
    %11 = arith.addf %8, %10 : vector<16x32xf32>
    %cst_10 = arith.constant 0.000000e+00 : f32
    %12 = vector.broadcast %cst_10 : f32 to vector<16x32xf32>
    %13 = arith.maximumf %11, %12 : vector<16x32xf32>
    %14 = arith.truncf %13 : vector<16x32xf32> to vector<16x32xbf16>
    %c0_11 = arith.constant 0 : index
    %c0_12 = arith.constant 0 : index
    %15 = vector.load %arg6[%c0_11, %c0_12] : memref<32x16xbf16, #tpu.memory_space<vmem>>, vector<32x16xbf16>
    %cst_13 = arith.constant dense<0.000000e+00> : vector<16x16xf32>
    %16 = tpu.matmul %14, %15, %cst_13 {dimension_numbers = #tpu.dot_dimension_numbers<[1], [0], [0], [1], [0, 0, 1, 1], [], []>} : vector<16x32xbf16>, vector<32x16xbf16>, vector<16x16xf32> -> vector<16x16xf32>
    %c0_14 = arith.constant 0 : index
    %c0_15 = arith.constant 0 : index
    %17 = vector.load %arg7[%c0_14, %c0_15] : memref<1x16xf32, #tpu.memory_space<vmem>>, vector<1x16xf32>
    %18 = vector.broadcast %17 : vector<1x16xf32> to vector<16x16xf32>
    %19 = arith.addf %16, %18 : vector<16x16xf32>
    %c0_16 = arith.constant 0 : index
    %c0_17 = arith.constant 0 : index
    %20 = vector.load %arg8[%c0_16, %c0_17] : memref<16x16xf32, #tpu.memory_space<vmem>>, vector<16x16xf32>
    tpu.vector_store %arg8[%c0_16, %c0_17], %19 {strides = array<i32>} : memref<16x16xf32, #tpu.memory_space<vmem>>, vector<16x16xf32>,
    return
  }
  func.func @transform_0(%arg0: i32) -> (i32, i32) {
    %c0_i32 = arith.constant 0 : i32
    %c0_i32_0 = arith.constant 0 : i32
    return %arg0, %c0_i32 : i32, i32
  }
  func.func @transform_1(%arg0: i32) -> (i32, i32) {
    %c0_i32 = arith.constant 0 : i32
    %c0_i32_0 = arith.constant 0 : i32
    return %arg0, %c0_i32 : i32, i32
  }
  func.func @transform_2(%arg0: i32) -> (i32, i32) {
    %c0_i32 = arith.constant 0 : i32
    %c0_i32_0 = arith.constant 0 : i32
    %c0_i32_1 = arith.constant 0 : i32
    return %c0_i32, %c0_i32_0 : i32, i32
  }
  func.func @transform_3(%arg0: i32) -> (i32, i32) {
    %c0_i32 = arith.constant 0 : i32
    %c0_i32_0 = arith.constant 0 : i32
    %c0_i32_1 = arith.constant 0 : i32
    return %c0_i32, %c0_i32_0 : i32, i32
  }
  func.func @transform_4(%arg0: i32) -> (i32, i32) {
    %c0_i32 = arith.constant 0 : i32
    %c0_i32_0 = arith.constant 0 : i32
    %c0_i32_1 = arith.constant 0 : i32
    return %c0_i32, %c0_i32_0 : i32, i32
  }
  func.func @transform_5(%arg0: i32) -> (i32, i32) {
    %c0_i32 = arith.constant 0 : i32
    %c0_i32_0 = arith.constant 0 : i32
    %c0_i32_1 = arith.constant 0 : i32
    return %c0_i32, %c0_i32_0 : i32, i32
  }
  func.func @transform_6(%arg0: i32) -> (i32, i32) {
    %c0_i32 = arith.constant 0 : i32
    %c0_i32_0 = arith.constant 0 : i32
    %c0_i32_1 = arith.constant 0 : i32
    return %c0_i32, %c0_i32_0 : i32, i32
  }
  func.func @transform_7(%arg0: i32) -> (i32, i32) {
    %c0_i32 = arith.constant 0 : i32
    %c0_i32_0 = arith.constant 0 : i32
    return %arg0, %c0_i32 : i32, i32
  }
}

</mosaic_0001>

<llo_original>
// kernel: tpu_custom_call.1
$region0: #{tpu_custom_call.1}
  #allocation0 [shape = 'u32[]', space=smem, size = 0x4, offset = 0x4, fixed_abs, tag = 'smem constant byte address 0x4 - core index']
  #allocation1 [shape = 'u32[72,128]{1,0:T(1,128)}', space=vmem, size = 0x9000, scoped, tag = 'internal scratch']
  %s0 = inlined_call_operand.vmem [shape: f32[16,16], index: 0, kind: input, shape index: {}]
  %s1 = inlined_call_operand.hbm [shape: f32[16,16], index: 1, kind: input, shape index: {}]
  %s2 = inlined_call_operand.vmem [shape: bf16[16,32], index: 2, kind: input, shape index: {}]
  %s3 = inlined_call_operand.hbm [shape: bf16[16,32], index: 3, kind: input, shape index: {}]
  %s4 = inlined_call_operand.vmem [shape: f32[1,32], index: 4, kind: input, shape index: {}]
  %s5 = inlined_call_operand.vmem [shape: bf16[32,16], index: 5, kind: input, shape index: {}]
  %s6 = inlined_call_operand.vmem [shape: f32[1,16], index: 6, kind: input, shape index: {}]
  %s7 = inlined_call_operand.hbm [shape: f32[16,16], index: 7, kind: output, shape index: {}]
  %s8 = sld [smem:[#allocation0]]
  $region46: #{tpu_custom_call.1} parent=0
    _
  %s10 = ssub.s32 1, %s8
  %s11 = scalar_select 0, %s10, %s8
  $region1: #{tpu_custom_call.1} parent=0
    #allocation2 [shape = 'u8[8192]{0}', space=vmem, size = 0x2000, scoped, tag = 'input window, operand 1, single buffered']
    #allocation3 [shape = 's32[1]{0}', space=sflag, size = 0x4, scoped, tag = 'scoped memory for tpu_custom_call.1']
    #allocation4 [shape = 's32[1]{0}', space=sflag, size = 0x4, scoped, tag = 'scoped memory for tpu_custom_call.1']
    #allocation5 [shape = 'u8[4096]{0}', space=vmem, size = 0x1000, scoped, tag = 'input window, operand 3, single buffered']
    #allocation6 [shape = 's32[1]{0}', space=sflag, size = 0x4, scoped, tag = 'scoped memory for tpu_custom_call.1']
    #allocation7 [shape = 'u8[8192]{0}', space=vmem, size = 0x2000, scoped, tag = 'output window, operand 0, single buffered']
    %12 = vsyncpa [#allocation3], 0
    %13 = vsyncpa [#allocation6], 0
    %14 = vsyncpa [#allocation4], 0
    // Predicated region
    $region2: #{tpu_custom_call.1} parent=1 // pred_check
      _
    $region3: #{tpu_custom_call.1} parent=1 // pred_check_branch
      %16 = sbr.rel (0) target = $region5
    $region4: #{tpu_custom_call.1} parent=1 // pred_region
      _
    $region5: #{tpu_custom_call.1} parent=1 // pred_fallthru
      _
    // Predicated region
    $region6: #{tpu_custom_call.1} parent=1 // pred_check
      _
    $region7: #{tpu_custom_call.1} parent=1 // pred_check_branch
      %18 = sbr.rel (0) target = $region9
    $region8: #{tpu_custom_call.1} parent=1 // pred_region
      %20 = vsyncadd [#allocation3], 0
      %s21 = sshll.u32 %s1, 4
      %s22 = int_to_ptr.hbm [resolvable:$true] %s21
      %s23 = sshll.u32 [#allocation2], 4
      %s24 = int_to_ptr.vmem [resolvable:$true] %s23
      %29 = dma.hbm_to_vmem [thread:$0]  %s22, 256, %s24, [#allocation3], 128, 128, 8
    $region9: #{tpu_custom_call.1} parent=1 // pred_fallthru
      _
    // Predicated region
    $region10: #{tpu_custom_call.1} parent=1 // pred_check
      _
    $region11: #{tpu_custom_call.1} parent=1 // pred_check_branch
      %31 = sbr.rel (0) target = $region13
    $region12: #{tpu_custom_call.1} parent=1 // pred_region
      _
    $region13: #{tpu_custom_call.1} parent=1 // pred_fallthru
      _
    // Predicated region
    $region14: #{tpu_custom_call.1} parent=1 // pred_check
      _
    $region15: #{tpu_custom_call.1} parent=1 // pred_check_branch
      %33 = sbr.rel (0) target = $region17
    $region16: #{tpu_custom_call.1} parent=1 // pred_region
      %35 = vsyncadd [#allocation6], 0
      %s36 = sshll.u32 %s3, 4
      %s37 = int_to_ptr.hbm [resolvable:$true] %s36
      %s38 = sshll.u32 [#allocation5], 4
      %s39 = int_to_ptr.vmem [resolvable:$true] %s38
      %44 = dma.hbm_to_vmem [thread:$0]  %s37, 128, %s39, [#allocation6], 64, 64, 4
    $region17: #{tpu_custom_call.1} parent=1 // pred_fallthru
      _
    // Predicated region
    $region18: #{tpu_custom_call.1} parent=1 // pred_check
      _
    $region19: #{tpu_custom_call.1} parent=1 // pred_check_branch
      %46 = sbr.rel (0) target = $region21
    $region20: #{tpu_custom_call.1} parent=1 // pred_region
      _
    $region21: #{tpu_custom_call.1} parent=1 // pred_fallthru
      _
    // Predicated region
    $region22: #{tpu_custom_call.1} parent=1 // pred_check
      _
    $region23: #{tpu_custom_call.1} parent=1 // pred_check_branch
      %48 = sbr.rel (0) target = $region25
    $region24: #{tpu_custom_call.1} parent=1 // pred_region
      _
    $region25: #{tpu_custom_call.1} parent=1 // pred_fallthru
      _
    // Predicated region
    $region26: #{tpu_custom_call.1} parent=1 // pred_check
      _
    $region27: #{tpu_custom_call.1} parent=1 // pred_check_branch
      %50 = sbr.rel (0) target = $region29
    $region28: #{tpu_custom_call.1} parent=1 // pred_region
      _
    $region29: #{tpu_custom_call.1} parent=1 // pred_fallthru
      _
    // Predicated region
    $region30: #{tpu_custom_call.1} parent=1 // pred_check
      _
    $region31: #{tpu_custom_call.1} parent=1 // pred_check_branch
      %52 = sbr.rel (0) target = $region33
    $region32: #{tpu_custom_call.1} parent=1 // pred_region
      %54 = dma.done [#allocation3], 256
    $region33: #{tpu_custom_call.1} parent=1 // pred_fallthru
      _
    // Predicated region
    $region34: #{tpu_custom_call.1} parent=1 // pred_check
      _
    $region35: #{tpu_custom_call.1} parent=1 // pred_check_branch
      %56 = sbr.rel (0) target = $region37
    $region36: #{tpu_custom_call.1} parent=1 // pred_region
      %58 = dma.done [#allocation6], 128
    $region37: #{tpu_custom_call.1} parent=1 // pred_fallthru
      _
    %v60 = vld [vmem:[%s0] sm:$0xff]
    %v61 = vld [vmem:[%s0 + $0x8] sm:$0xff]
    %v62 = vpack.c.bf16 %v61, %v60
    %v63 = vld [vmem:[%s2] sm:$0xf]
    %v64 = vld [vmem:[%s2 + $0x4] sm:$0xf]
    %v65 = vld [vmem:[#allocation2] sm:$0xff]
    %v66 = vld [vmem:[#allocation2 + $0x8] sm:$0xff]
    %v67 = vpack.c.bf16 %v66, %v65
    %v68 = vld [vmem:[#allocation5] sm:$0xf]
    %v69 = vld [vmem:[#allocation5 + $0x4] sm:$0xf]
    %v72 = vunpack.c.l.b16 %v68
    %v73 = vunpack.c.l.b16 %v69
    %v74 = vpack.c.b16 %v73, %v72
    %vm76 = vcmask 130048
    %v78 = vsel %vm76, %v67, 0
    %80 = vmatpush.bf16.msra.mxu0 0
    %81 = vmatpush.bf16.msra.mxu0 0
    %82 = vmatpush.bf16.msra.mxu0 0
    %83 = vmatpush.bf16.msra.mxu0 0
    %84 = vmatpush.bf16.msra.mxu0 0
    %85 = vmatpush.bf16.msra.mxu0 0
    %86 = vmatpush.bf16.msra.mxu0 0
    %87 = vmatpush.bf16.msra.mxu0 %v74
    %88 = vmatmul.bf16.gmra.mxu0 %v78
    %v89 = vpop.f32.mrf.mxu0
    %v90 = vadd.f32 0.0, %v89
    %v91 = vpop.f32.mrf.mxu0
    %v92 = vadd.f32 0.0, %v91
    %93 = vdwg.mxu0
    %v96 = vunpack.c.l.b16 %v63
    %v97 = vunpack.c.l.b16 %v64
    %v98 = vpack.c.b16 %v97, %v96
    %v101 = vsel %vm76, %v62, 0
    %103 = vmatpush.bf16.msra.mxu0 0
    %104 = vmatpush.bf16.msra.mxu0 0
    %105 = vmatpush.bf16.msra.mxu0 0
    %106 = vmatpush.bf16.msra.mxu0 0
    %107 = vmatpush.bf16.msra.mxu0 0
    %108 = vmatpush.bf16.msra.mxu0 0
    %109 = vmatpush.bf16.msra.mxu0 0
    %110 = vmatpush.bf16.msra.mxu0 %v98
    %111 = vmatmul.bf16.gmra.mxu0 %v101
    %v112 = vpop.f32.mrf.mxu0
    %v113 = vadd.f32 %v90, %v112
    %v114 = vpop.f32.mrf.mxu0
    %v115 = vadd.f32 %v92, %v114
    %116 = vdwg.mxu0
    %v117 = vld [vmem:[%s4] sm:$0x1]
    %v119 = vperm.slane %v117, 0
    %v121 = vadd.f32 %v113, %v119
    %v122 = vadd.f32 %v115, %v119
    %v123 = vmax.f32 %v121, 0.0
    %v124 = vmax.f32 %v122, 0.0
    %v125 = vpack.c.bf16 %v124, %v123
    %v126 = vld [vmem:[%s5] sm:$0xf]
    %v127 = vld [vmem:[%s5 + $0x4] sm:$0xf]
    %v128 = vld [vmem:[%s5 + $0x8] sm:$0xf]
    %v129 = vld [vmem:[%s5 + $0xc] sm:$0xf]
    %v130 = vld [vmem:[%s6] sm:$0x1]
    %v132 = vperm.slane %v130, 0
    %v138 = vunpack.c.l.b16 %v126
    %v139 = vunpack.c.l.b16 %v127
    %v140 = vunpack.c.l.b16 %v128
    %v141 = vunpack.c.l.b16 %v129
    %v142 = vpack.c.b16 %v139, %v138
    %v143 = vpack.c.b16 %v141, %v140
    %vm146 = vcmask 261120
    %v148 = vsel %vm146, %v125, 0
    %150 = vmatpush.bf16.msra.mxu0 0
    %151 = vmatpush.bf16.msra.mxu0 0
    %152 = vmatpush.bf16.msra.mxu0 0
    %153 = vmatpush.bf16.msra.mxu0 0
    %154 = vmatpush.bf16.msra.mxu0 0
    %155 = vmatpush.bf16.msra.mxu0 0
    %156 = vmatpush.bf16.msra.mxu0 %v143
    %157 = vmatpush.bf16.msra.mxu0 %v142
    %158 = vmatmul.bf16.gmra.mxu0 %v148
    %v159 = vpop.f32.mrf.mxu0
    %v160 = vadd.f32 %v132, %v159
    %v161 = vpop.f32.mrf.mxu0
    %v162 = vadd.f32 %v132, %v161
    %163 = vdwg.mxu0
    %164 = vst.msk [vmem:[#allocation7] sm:$0xff] %vm76, %v160
    %165 = vst.msk [vmem:[#allocation7 + $0x8] sm:$0xff] %vm76, %v162
    // Predicated region
    $region38: #{tpu_custom_call.1} parent=1 // pred_check
      _
    $region39: #{tpu_custom_call.1} parent=1 // pred_check_branch
      %167 = sbr.rel (0) target = $region41
    $region40: #{tpu_custom_call.1} parent=1 // pred_region
      %169 = vsyncadd [#allocation4], 0
      %s170 = sshll.u32 [#allocation7], 4
      %s171 = int_to_ptr.vmem [resolvable:$true] %s170
      %s172 = sshll.u32 %s7, 4
      %s173 = int_to_ptr.hbm [resolvable:$true] %s172
      %178 = dma.vmem_to_hbm [thread:$0]  %s171, 256, %s173, [#allocation4], 128, 128, 8
    $region41: #{tpu_custom_call.1} parent=1 // pred_fallthru
      _
    // Predicated region
    $region42: #{tpu_custom_call.1} parent=1 // pred_check
      _
    $region43: #{tpu_custom_call.1} parent=1 // pred_check_branch
      %180 = sbr.rel (0) target = $region45
    $region44: #{tpu_custom_call.1} parent=1 // pred_region
      %182 = dma.done [#allocation4], 256
    $region45: #{tpu_custom_call.1} parent=1 // pred_fallthru
      _
    %183 = vsyncpa [#allocation3], 1
    %184 = vsyncpa [#allocation6], 1
    %185 = vsyncpa [#allocation4], 1

</llo_original>
